<compile_context>
chip_gen: v7x
topology: tpu7x:2x2x1
jax: 0.10.0
libtpu: 0.0.40
codegen_flags: <defaults>
</compile_context>

<pallas_src>
import functools
import math

import jax
import jax.numpy as jnp
from jax.experimental import pallas as pl
from jax.experimental.pallas import tpu as pltpu


# --------------------------------------------------------------------------
# Kernel
# --------------------------------------------------------------------------
def actor_critic_kernel(
    x_ref,        # (TB, S)    f32 state block (cast to matmul dtype in-kernel)
    a_ref,        # (TB, A)    f32 action block
    inv_var_ref,  # (1, A)     f32  : 1 / action_var
    lc_ref,       # (1,)       f32  SMEM scalar: -0.5*(A*log(2pi) + sum(log var))
    w1_ref, b1_ref,   # (S, 128)  / (1, 128)   fused actor|critic layer 1
    w2_ref, b2_ref,   # (128, 64) / (1, 64)    block-diag layer 2
    w3_ref, b3_ref,   # (64, 128) / (1, 128)   block-diag layer 3, lane-padded
    out_ref,      # (TB, 2)    f32  : col 0 = logp, col 1 = value
    *, act_dtype,
):
    A = a_ref.shape[-1]
    mm_dtype = w1_ref.dtype
    f32 = jnp.float32

    # In-kernel cast of the f32 state block to the matmul dtype (avoids a
    # separate wrapper-side HBM pass).
    x = x_ref[...].astype(mm_dtype)

    # Layer 1: x @ [aw1 | cw1] -> (TB, 128); tanh in act_dtype
    # (bf16 on v6e/v7x doubles EUP throughput; f32 on v5e).
    z1 = jnp.dot(x, w1_ref[...], preferred_element_type=f32) + b1_ref[...]
    h1 = jnp.tanh(z1.astype(act_dtype))

    # Layer 2: block-diag(aw2, cw2) -> (TB, 64).
    z2 = jnp.dot(h1.astype(mm_dtype), w2_ref[...],
                 preferred_element_type=f32) + b2_ref[...]
    h2 = jnp.tanh(z2.astype(act_dtype))

    # Layer 3: block-diag(aw3, cw3), zero-padded to 128 lanes -> (TB, 128).
    z3 = jnp.dot(h2.astype(mm_dtype), w3_ref[...],
                 preferred_element_type=f32) + b3_ref[...]

    action_mean = jnp.tanh(z3[:, :A])      # actor head gets the final tanh (f32)
    state_value = z3[:, A:A + 1]           # critic head: no tanh

    # Diagonal-covariance MVN log_prob(action); constants / 1/var hoisted to
    # the wrapper (no log or divide in the hot loop).
    diff = a_ref[...] - action_mean                                   # (TB, A)
    maha = jnp.sum(diff * diff * inv_var_ref[...], axis=-1, keepdims=True)
    logp = lc_ref[0] - 0.5 * maha                                     # (TB, 1)

    # Single store (vs. two masked strided column stores).
    out_ref[...] = jnp.concatenate([logp, state_value], axis=-1)


# --------------------------------------------------------------------------
# Wrapper
# --------------------------------------------------------------------------
def _round_up(x, m):
    return (x + m - 1) // m * m


def _supports_bf16_eup():
    """bf16 VPU/EUP path exists on v6e/v7x, not on v5e and older."""
    try:
        kind = jax.devices()[0].device_kind.lower()
    except Exception:
        return False
    return any(tag in kind for tag in ("v6", "v7", "7x"))


def _choose_tile(B, tb_max):
    """Large tiles, but >=2 grid steps so v7x's two TCs both get work."""
    if B <= 8:
        return 8
    half = _round_up((B + 1) // 2, 8)
    return max(8, min(tb_max, half))


def actor_critic_evaluate(state, action, params, action_var, *,
                          matmul_dtype=jnp.bfloat16, act_dtype=None,
                          tb_max=4096):
    """Returns (action_logprobs [B], state_value [B], dist_entropy [B])."""
    B, S = state.shape
    A = action.shape[-1]
    f32 = jnp.float32

    if act_dtype is None:
        act_dtype = (jnp.bfloat16
                     if (matmul_dtype == jnp.bfloat16 and _supports_bf16_eup())
                     else f32)

    # ---- pack fused weights (plain JAX, once per call) ----
    h1a = params["aw2"].shape[0]          # 64
    h2a = params["aw2"].shape[1]          # 32
    H1 = h1a + params["cw2"].shape[0]     # 128
    H2 = h2a + params["cw2"].shape[1]     # 64
    OUT = 128                             # lane-padded layer-3 output width

    w1 = jnp.concatenate([params["aw1"], params["cw1"]], axis=1)          # (S, 128)
    b1 = jnp.concatenate([params["ab1"], params["cb1"]]).reshape(1, -1)   # (1, 128)

    w2 = jnp.zeros((H1, H2), f32)
    w2 = w2.at[:h1a, :h2a].set(params["aw2"]).at[h1a:, h2a:].set(params["cw2"])
    b2 = jnp.concatenate([params["ab2"], params["cb2"]]).reshape(1, -1)   # (1, 64)

    # Layer 3 packed block-diagonally and zero-padded to 128 lanes:
    # cols [0:A] = actor head, col [A] = critic value, rest zeros.
    w3 = jnp.zeros((H2, OUT), f32)
    w3 = w3.at[:h2a, :A].set(params["aw3"]).at[h2a:, A:A + 1].set(params["cw3"])
    b3 = jnp.zeros((1, OUT), f32)
    b3 = b3.at[0, :A].set(params["ab3"]).at[0, A].set(params["cb3"][0])

    w1 = w1.astype(matmul_dtype)
    w2 = w2.astype(matmul_dtype)
    w3 = w3.astype(matmul_dtype)
    b1, b2, b3 = b1.astype(f32), b2.astype(f32), b3.astype(f32)

    # ---- hoisted MVN scalars ----
    inv_var = (1.0 / action_var).reshape(1, A).astype(f32)
    sum_log_var = jnp.sum(jnp.log(action_var))
    logp_const = (-0.5 * (A * math.log(2.0 * math.pi) + sum_log_var)
                  ).reshape(1).astype(f32)                    # SMEM scalar
    ent_const = (0.5 * A * (1.0 + math.log(2.0 * math.pi))
                 + 0.5 * sum_log_var).astype(f32)

    # ---- batch tiling: no wrapper-side padding; ragged last tile is handled
    #      by Pallas (out-of-range rows are never written back) ----
    TB = _choose_tile(B, tb_max)
    num_tiles = pl.cdiv(B, TB)

    state = state.astype(f32)    # no-op for typical f32 inputs
    action = action.astype(f32)

    batch_map = lambda i: (i, 0)   # tiled along batch
    const_map = lambda i: (0, 0)   # VMEM-resident across the whole grid

    # ---- scheduler hints ----
    mm_isize = jnp.dtype(matmul_dtype).itemsize
    weight_bytes = (w1.size + w2.size + w3.size) * mm_isize \
        + (b1.size + b2.size + b3.size) * 4
    flops = 2 * B * (S * H1 + H1 * H2 + H2 * OUT) + 6 * B * A
    transcendentals = B * (H1 + H2 + A)
    bytes_accessed = B * (4 * S + 4 * A + 8) + weight_bytes

    compiler_kwargs = dict(dimension_semantics=("parallel",))
    vmem_est = (2 * TB * (4 * S + 4 * A + 8)            # double-buffered I/O blocks
                + TB * (H1 + H2 + OUT) * 4              # f32 intermediates
                + weight_bytes + (1 << 20))
    if vmem_est > (30 << 20):                           # only for very large tiles
        compiler_kwargs["vmem_limit_bytes"] = int(min(vmem_est + (4 << 20),
                                                      60 << 20))

    kernel = functools.partial(actor_critic_kernel, act_dtype=act_dtype)

    out = pl.pallas_call(
        kernel,
        out_shape=jax.ShapeDtypeStruct((B, 2), f32),
        grid=(num_tiles,),
        in_specs=[
            pl.BlockSpec((TB, S), batch_map),                          # state
            pl.BlockSpec((TB, A), batch_map),                          # action
            pl.BlockSpec((1, A), const_map),                           # inv_var
            pl.BlockSpec(memory_space=pltpu.MemorySpace.SMEM),         # logp const
            pl.BlockSpec(w1.shape, const_map),
            pl.BlockSpec(b1.shape, const_map),
            pl.BlockSpec(w2.shape, const_map),
            pl.BlockSpec(b2.shape, const_map),
            pl.BlockSpec(w3.shape, const_map),
            pl.BlockSpec(b3.shape, const_map),
        ],
        out_specs=pl.BlockSpec((TB, 2), batch_map),
        compiler_params=pltpu.CompilerParams(**compiler_kwargs),
        cost_estimate=pl.CostEstimate(
            flops=int(flops),
            transcendentals=int(transcendentals),
            bytes_accessed=int(bytes_accessed)),
    )(state, action, inv_var, logp_const, w1, b1, w2, b2, w3, b3)

    logp = out[:, 0]
    value = out[:, 1]
    entropy = jnp.full((B,), ent_const, f32)   # MVN entropy is batch-independent
    return logp, value, entropy


# --------------------------------------------------------------------------
# Init + pure-JAX reference (mirrors the kernel's matmul / activation dtypes)
# --------------------------------------------------------------------------
def init_params(key, state_dim, action_dim):
    """PyTorch-style Linear init; weights stored as [in, out]."""
    ks = jax.random.split(key, 12)

    def lin(kw, kb, fan_in, fan_out):
        bound = 1.0 / math.sqrt(fan_in)
        w = jax.random.uniform(kw, (fan_in, fan_out), jnp.float32, -bound, bound)
        b = jax.random.uniform(kb, (fan_out,), jnp.float32, -bound, bound)
        return w, b

    p = {}
    p["aw1"], p["ab1"] = lin(ks[0], ks[1], state_dim, 64)
    p["aw2"], p["ab2"] = lin(ks[2], ks[3], 64, 32)
    p["aw3"], p["ab3"] = lin(ks[4], ks[5], 32, action_dim)
    p["cw1"], p["cb1"] = lin(ks[6], ks[7], state_dim, 64)
    p["cw2"], p["cb2"] = lin(ks[8], ks[9], 64, 32)
    p["cw3"], p["cb3"] = lin(ks[10], ks[11], 32, 1)
    return p


def reference_evaluate(state, action, params, action_var, *,
                       matmul_dtype=jnp.bfloat16, act_dtype=jnp.float32):
    def mm(x, w):
        return jnp.dot(x.astype(matmul_dtype), w.astype(matmul_dtype),
                       preferred_element_type=jnp.float32)

    def layer(x, w, b):
        return jnp.tanh((mm(x, w) + b).astype(act_dtype))

    h = layer(state, params["aw1"], params["ab1"])
    h = layer(h, params["aw2"], params["ab2"])
    mean = jnp.tanh(mm(h, params["aw3"]) + params["ab3"])

    v = layer(state, params["cw1"], params["cb1"])
    v = layer(v, params["cw2"], params["cb2"])
    value = (mm(v, params["cw3"]) + params["cb3"])[:, 0]

    k = mean.shape[-1]
    diff = action - mean
    logp = (-0.5 * jnp.sum(diff * diff / action_var, axis=-1)
            - 0.5 * k * math.log(2 * math.pi)
            - 0.5 * jnp.sum(jnp.log(action_var)))
    ent = jnp.full((state.shape[0],),
                   0.5 * k * (1 + math.log(2 * math.pi))
                   + 0.5 * jnp.sum(jnp.log(action_var)))
    return logp, value, ent


# --------------------------------------------------------------------------
if __name__ == "__main__":
    state_dim, action_dim, action_std = 32, 4, 0.5
    key = jax.random.PRNGKey(0)
    k_param, k_state, k_action = jax.random.split(key, 3)

    params = init_params(k_param, state_dim, action_dim)
    action_var = jnp.full((action_dim,), action_std * action_std, jnp.float32)

    # --- test 1: single tile, pure f32 path (exact semantics of the module) ---
    B = 8
    state = jax.random.normal(k_state, (B, state_dim), jnp.float32)
    action = jax.random.normal(k_action, (B, action_dim), jnp.float32)

    lp, val, ent = actor_critic_evaluate(state, action, params, action_var,
                                         matmul_dtype=jnp.float32,
                                         act_dtype=jnp.float32)
    jax.block_until_ready((lp, val, ent))
    rlp, rval, rent = reference_evaluate(state, action, params, action_var,
                                         matmul_dtype=jnp.float32,
                                         act_dtype=jnp.float32)
    assert jnp.allclose(lp, rlp, atol=1e-3, rtol=1e-3), "f32 logprob mismatch"
    assert jnp.allclose(val, rval, atol=1e-3, rtol=1e-3), "f32 value mismatch"
    assert jnp.allclose(ent, rent, atol=1e-5), "f32 entropy mismatch"

    # --- test 2: multi-tile grid + ragged last tile, bf16 MXU, f32 tanh ---
    B2 = 40
    k_s2, k_a2 = jax.random.split(jax.random.PRNGKey(1), 2)
    state2 = jax.random.normal(k_s2, (B2, state_dim), jnp.float32)
    action2 = jax.random.normal(k_a2, (B2, action_dim), jnp.float32)

    lp2, val2, ent2 = actor_critic_evaluate(state2, action2, params, action_var,
                                            matmul_dtype=jnp.bfloat16,
                                            act_dtype=jnp.float32,
                                            tb_max=16)   # 3 tiles: 16,16,8(ragged)
    jax.block_until_ready((lp2, val2, ent2))
    rlp2, rval2, rent2 = reference_evaluate(state2, action2, params, action_var,
                                            matmul_dtype=jnp.bfloat16,
                                            act_dtype=jnp.float32)
    assert jnp.allclose(lp2, rlp2, atol=5e-3, rtol=5e-3), "bf16 logprob mismatch"
    assert jnp.allclose(val2, rval2, atol=5e-3, rtol=5e-3), "bf16 value mismatch"
    assert jnp.allclose(ent2, rent2, atol=1e-5), "bf16 entropy mismatch"

    # --- test 3: device-default path (bf16 tanh on v6e/v7x, f32 on v5e) ---
    # bf16-EUP tanh can differ from the XLA reference by ~1 bf16 ulp per
    # activation, so the tolerance is looser here (documents the precision
    # trade-off flagged in the review).
    act_dt = jnp.bfloat16 if _supports_bf16_eup() else jnp.float32
    lp3, val3, ent3 = actor_critic_evaluate(state2, action2, params, action_var)
    jax.block_until_ready((lp3, val3, ent3))
    rlp3, rval3, rent3 = reference_evaluate(state2, action2, params, action_var,
                                            matmul_dtype=jnp.bfloat16,
                                            act_dtype=act_dt)
    assert jnp.allclose(lp3, rlp3, atol=0.15, rtol=0.05), "default-path logprob mismatch"
    assert jnp.allclose(val3, rval3, atol=0.05, rtol=0.05), "default-path value mismatch"
    assert jnp.allclose(ent3, rent3, atol=1e-5), "default-path entropy mismatch"

    # TODO(synk): act() (MVN sampling) is not implemented; evaluate() is the
    # forward pass realized here (forward() raises NotImplementedError).
    print("KERNEL_OK")
</pallas_src>

<mosaic_0001>
module attributes {stable_mosaic.version = 11 : i64} {
  func.func @actor_critic_kernel(%arg0: i32, %arg1: memref<8x32xf32, #tpu.memory_space<vmem>>, %arg2: memref<8x4xf32, #tpu.memory_space<vmem>>, %arg3: memref<1x4xf32, #tpu.memory_space<vmem>>, %arg4: memref<1xf32, #tpu.memory_space<smem>>, %arg5: memref<32x128xf32, #tpu.memory_space<vmem>>, %arg6: memref<1x128xf32, #tpu.memory_space<vmem>>, %arg7: memref<128x64xf32, #tpu.memory_space<vmem>>, %arg8: memref<1x64xf32, #tpu.memory_space<vmem>>, %arg9: memref<64x128xf32, #tpu.memory_space<vmem>>, %arg10: memref<1x128xf32, #tpu.memory_space<vmem>>, %arg11: memref<8x2xf32, #tpu.memory_space<vmem>>) attributes {dimension_semantics = [#tpu.dimension_semantics<parallel>], iteration_bounds = array<i64: 1>, scalar_prefetch = 0 : i64, scratch_operands = 0 : i64, tpu.core_type = #tpu.core_type<tc>, window_params = [{transform_indices = @transform_0, window_bounds = array<i64: 8, 32>}, {transform_indices = @transform_1, window_bounds = array<i64: 8, 4>}, {pipeline_mode = #tpu.pipeline_mode<synchronous>, transform_indices = @transform_2, window_bounds = array<i64: 1, 4>}, {transform_indices = @transform_3, window_bounds = array<i64: 1>}, {pipeline_mode = #tpu.pipeline_mode<synchronous>, transform_indices = @transform_4, window_bounds = array<i64: 32, 128>}, {pipeline_mode = #tpu.pipeline_mode<synchronous>, transform_indices = @transform_5, window_bounds = array<i64: 1, 128>}, {pipeline_mode = #tpu.pipeline_mode<synchronous>, transform_indices = @transform_6, window_bounds = array<i64: 128, 64>}, {pipeline_mode = #tpu.pipeline_mode<synchronous>, transform_indices = @transform_7, window_bounds = array<i64: 1, 64>}, {pipeline_mode = #tpu.pipeline_mode<synchronous>, transform_indices = @transform_8, window_bounds = array<i64: 64, 128>}, {pipeline_mode = #tpu.pipeline_mode<synchronous>, transform_indices = @transform_9, window_bounds = array<i64: 1, 128>}, {transform_indices = @transform_10, window_bounds = array<i64: 8, 2>}]} {
    %c0 = arith.constant 0 : index
    %c0_0 = arith.constant 0 : index
    %0 = vector.load %arg1[%c0, %c0_0] : memref<8x32xf32, #tpu.memory_space<vmem>>, vector<8x32xf32>
    %c0_1 = arith.constant 0 : index
    %c0_2 = arith.constant 0 : index
    %1 = vector.load %arg5[%c0_1, %c0_2] : memref<32x128xf32, #tpu.memory_space<vmem>>, vector<32x128xf32>
    %cst = arith.constant dense<0.000000e+00> : vector<8x128xf32>
    %2 = tpu.matmul %0, %1, %cst {dimension_numbers = #tpu.dot_dimension_numbers<[1], [0], [0], [1], [0, 0, 1, 1], [], []>} : vector<8x32xf32>, vector<32x128xf32>, vector<8x128xf32> -> vector<8x128xf32>
    %c0_3 = arith.constant 0 : index
    %c0_4 = arith.constant 0 : index
    %3 = vector.load %arg6[%c0_3, %c0_4] : memref<1x128xf32, #tpu.memory_space<vmem>>, vector<1x128xf32>
    %4 = vector.broadcast %3 : vector<1x128xf32> to vector<8x128xf32>
    %5 = arith.addf %2, %4 : vector<8x128xf32>
    %6 = math.tanh %5 : vector<8x128xf32>
    %c0_5 = arith.constant 0 : index
    %c0_6 = arith.constant 0 : index
    %7 = vector.load %arg7[%c0_5, %c0_6] : memref<128x64xf32, #tpu.memory_space<vmem>>, vector<128x64xf32>
    %cst_7 = arith.constant dense<0.000000e+00> : vector<8x64xf32>
    %8 = tpu.matmul %6, %7, %cst_7 {dimension_numbers = #tpu.dot_dimension_numbers<[1], [0], [0], [1], [0, 0, 1, 1], [], []>} : vector<8x128xf32>, vector<128x64xf32>, vector<8x64xf32> -> vector<8x64xf32>
    %c0_8 = arith.constant 0 : index
    %c0_9 = arith.constant 0 : index
    %9 = vector.load %arg8[%c0_8, %c0_9] : memref<1x64xf32, #tpu.memory_space<vmem>>, vector<1x64xf32>
    %10 = vector.broadcast %9 : vector<1x64xf32> to vector<8x64xf32>
    %11 = arith.addf %8, %10 : vector<8x64xf32>
    %12 = math.tanh %11 : vector<8x64xf32>
    %c0_10 = arith.constant 0 : index
    %c0_11 = arith.constant 0 : index
    %13 = vector.load %arg9[%c0_10, %c0_11] : memref<64x128xf32, #tpu.memory_space<vmem>>, vector<64x128xf32>
    %cst_12 = arith.constant dense<0.000000e+00> : vector<8x128xf32>
    %14 = tpu.matmul %12, %13, %cst_12 {dimension_numbers = #tpu.dot_dimension_numbers<[1], [0], [0], [1], [0, 0, 1, 1], [], []>} : vector<8x64xf32>, vector<64x128xf32>, vector<8x128xf32> -> vector<8x128xf32>
    %c0_13 = arith.constant 0 : index
    %c0_14 = arith.constant 0 : index
    %15 = vector.load %arg10[%c0_13, %c0_14] : memref<1x128xf32, #tpu.memory_space<vmem>>, vector<1x128xf32>
    %16 = vector.broadcast %15 : vector<1x128xf32> to vector<8x128xf32>
    %17 = arith.addf %14, %16 : vector<8x128xf32>
    %18 = vector.extract_strided_slice %17 {offsets = [0, 0], sizes = [8, 4], strides = [1, 1]} : vector<8x128xf32> to vector<8x4xf32>
    %19 = math.tanh %18 : vector<8x4xf32>
    %20 = vector.extract_strided_slice %17 {offsets = [0, 4], sizes = [8, 1], strides = [1, 1]} : vector<8x128xf32> to vector<8x1xf32>
    %c0_15 = arith.constant 0 : index
    %c0_16 = arith.constant 0 : index
    %21 = vector.load %arg2[%c0_15, %c0_16] : memref<8x4xf32, #tpu.memory_space<vmem>>, vector<8x4xf32>
    %22 = arith.subf %21, %19 : vector<8x4xf32>
    %23 = arith.mulf %22, %22 : vector<8x4xf32>
    %c0_17 = arith.constant 0 : index
    %c0_18 = arith.constant 0 : index
    %24 = vector.load %arg3[%c0_17, %c0_18] : memref<1x4xf32, #tpu.memory_space<vmem>>, vector<1x4xf32>
    %25 = vector.broadcast %24 : vector<1x4xf32> to vector<8x4xf32>
    %26 = arith.mulf %23, %25 : vector<8x4xf32>
    %cst_19 = arith.constant dense<0.000000e+00> : vector<8xf32>
    %27 = vector.multi_reduction <add>, %26, %cst_19 [1] : vector<8x4xf32> to vector<8xf32>
    %28 = vector.shape_cast %27 : vector<8xf32> to vector<8x1xf32>
    %c0_20 = arith.constant 0 : index
    %29 = memref.load %arg4[%c0_20] : memref<1xf32, #tpu.memory_space<smem>>
    %cst_21 = arith.constant 5.000000e-01 : f32
    %30 = vector.broadcast %cst_21 : f32 to vector<8x1xf32>
    %31 = arith.mulf %30, %28 : vector<8x1xf32>
    %32 = vector.broadcast %29 : f32 to vector<8x1xf32>
    %33 = arith.subf %32, %31 : vector<8x1xf32>
    %34 = tpu.concatenate %33, %20 in 1 : vector<8x1xf32>, vector<8x1xf32> -> vector<8x2xf32>
    %c0_22 = arith.constant 0 : index
    %c0_23 = arith.constant 0 : index
    %35 = vector.load %arg11[%c0_22, %c0_23] : memref<8x2xf32, #tpu.memory_space<vmem>>, vector<8x2xf32>
    tpu.vector_store %arg11[%c0_22, %c0_23], %34 {strides = array<i32>} : memref<8x2xf32, #tpu.memory_space<vmem>>, vector<8x2xf32>,
    return
  }
  func.func @transform_0(%arg0: i32) -> (i32, i32) {
    %c0_i32 = arith.constant 0 : i32
    %c0_i32_0 = arith.constant 0 : i32
    return %arg0, %c0_i32 : i32, i32
  }
  func.func @transform_1(%arg0: i32) -> (i32, i32) {
    %c0_i32 = arith.constant 0 : i32
    %c0_i32_0 = arith.constant 0 : i32
    return %arg0, %c0_i32 : i32, i32
  }
  func.func @transform_2(%arg0: i32) -> (i32, i32) {
    %c0_i32 = arith.constant 0 : i32
    %c0_i32_0 = arith.constant 0 : i32
    %c0_i32_1 = arith.constant 0 : i32
    return %c0_i32, %c0_i32_0 : i32, i32
  }
  func.func @transform_3(%arg0: i32) -> i32 {
    %c0_i32 = arith.constant 0 : i32
    %c0_i32_0 = arith.constant 0 : i32
    return %c0_i32 : i32
  }
  func.func @transform_4(%arg0: i32) -> (i32, i32) {
    %c0_i32 = arith.constant 0 : i32
    %c0_i32_0 = arith.constant 0 : i32
    %c0_i32_1 = arith.constant 0 : i32
    return %c0_i32, %c0_i32_0 : i32, i32
  }
  func.func @transform_5(%arg0: i32) -> (i32, i32) {
    %c0_i32 = arith.constant 0 : i32
    %c0_i32_0 = arith.constant 0 : i32
    %c0_i32_1 = arith.constant 0 : i32
    return %c0_i32, %c0_i32_0 : i32, i32
  }
  func.func @transform_6(%arg0: i32) -> (i32, i32) {
    %c0_i32 = arith.constant 0 : i32
    %c0_i32_0 = arith.constant 0 : i32
    %c0_i32_1 = arith.constant 0 : i32
    return %c0_i32, %c0_i32_0 : i32, i32
  }
  func.func @transform_7(%arg0: i32) -> (i32, i32) {
    %c0_i32 = arith.constant 0 : i32
    %c0_i32_0 = arith.constant 0 : i32
    %c0_i32_1 = arith.constant 0 : i32
    return %c0_i32, %c0_i32_0 : i32, i32
  }
  func.func @transform_8(%arg0: i32) -> (i32, i32) {
    %c0_i32 = arith.constant 0 : i32
    %c0_i32_0 = arith.constant 0 : i32
    %c0_i32_1 = arith.constant 0 : i32
    return %c0_i32, %c0_i32_0 : i32, i32
  }
  func.func @transform_9(%arg0: i32) -> (i32, i32) {
    %c0_i32 = arith.constant 0 : i32
    %c0_i32_0 = arith.constant 0 : i32
    %c0_i32_1 = arith.constant 0 : i32
    return %c0_i32, %c0_i32_0 : i32, i32
  }
  func.func @transform_10(%arg0: i32) -> (i32, i32) {
    %c0_i32 = arith.constant 0 : i32
    %c0_i32_0 = arith.constant 0 : i32
    return %arg0, %c0_i32 : i32, i32
  }
}

</mosaic_0001>

<llo_original>
// kernel: tpu_custom_call.1
$region0: #{tpu_custom_call.1}
  #allocation0 [shape = 'u32[]', space=smem, size = 0x4, offset = 0x4, fixed_abs, tag = 'smem constant byte address 0x4 - core index']
  #allocation1 [shape = 'u32[144,128]{1,0:T(1,128)}', space=vmem, size = 0x12000, scoped, tag = 'internal scratch']
  #allocation2 [shape = 'f32[1]{0:T(128)S(6)}', space=smem, size = 0x200, scoped, tag = 'scoped memory for tpu_custom_call.1']
  %s0 = inlined_call_operand.vmem [shape: f32[8,32], index: 0, kind: input, shape index: {}]
  %s1 = inlined_call_operand.vmem [shape: f32[8,4], index: 1, kind: input, shape index: {}]
  %s2 = inlined_call_operand.vmem [shape: f32[1,4], index: 2, kind: input, shape index: {}]
  %s3 = inlined_call_operand.<no memory space> [shape: f32[1], index: 3, kind: input, shape index: {}]
  %s4 = inlined_call_operand.vmem [shape: f32[32,128], index: 4, kind: input, shape index: {}]
  %s5 = inlined_call_operand.vmem [shape: f32[1,128], index: 5, kind: input, shape index: {}]
  %s6 = inlined_call_operand.vmem [shape: f32[128,64], index: 6, kind: input, shape index: {}]
  %s7 = inlined_call_operand.vmem [shape: f32[1,64], index: 7, kind: input, shape index: {}]
  %s8 = inlined_call_operand.vmem [shape: f32[64,128], index: 8, kind: input, shape index: {}]
  %s9 = inlined_call_operand.vmem [shape: f32[1,128], index: 9, kind: input, shape index: {}]
  %s10 = inlined_call_operand.vmem [shape: f32[8,2], index: 10, kind: output, shape index: {}]
  %s11 = sld [smem:[#allocation0]]
  $region50: #{tpu_custom_call.1} parent=0
    _
  %s13 = ssub.s32 1, %s11
  %s14 = scalar_select 0, %s13, %s11
  %15 = sst [smem:[#allocation2]] %s3
  // Predicated region
  $region2: #{tpu_custom_call.1} parent=0 // pred_check
    _
  $region3: #{tpu_custom_call.1} parent=0 // pred_check_branch
    %17 = sbr.rel (0) target = $region5
  $region4: #{tpu_custom_call.1} parent=0 // pred_region
    _
  $region5: #{tpu_custom_call.1} parent=0 // pred_fallthru
    _
  // Predicated region
  $region6: #{tpu_custom_call.1} parent=0 // pred_check
    _
  $region7: #{tpu_custom_call.1} parent=0 // pred_check_branch
    %19 = sbr.rel (0) target = $region9
  $region8: #{tpu_custom_call.1} parent=0 // pred_region
    _
  $region9: #{tpu_custom_call.1} parent=0 // pred_fallthru
    _
  // Predicated region
  $region10: #{tpu_custom_call.1} parent=0 // pred_check
    _
  $region11: #{tpu_custom_call.1} parent=0 // pred_check_branch
    %21 = sbr.rel (0) target = $region13
  $region12: #{tpu_custom_call.1} parent=0 // pred_region
    _
  $region13: #{tpu_custom_call.1} parent=0 // pred_fallthru
    _
  // Predicated region
  $region14: #{tpu_custom_call.1} parent=0 // pred_check
    _
  $region15: #{tpu_custom_call.1} parent=0 // pred_check_branch
    %23 = sbr.rel (0) target = $region17
  $region16: #{tpu_custom_call.1} parent=0 // pred_region
    _
  $region17: #{tpu_custom_call.1} parent=0 // pred_fallthru
    _
  // Predicated region
  $region18: #{tpu_custom_call.1} parent=0 // pred_check
    _
  $region19: #{tpu_custom_call.1} parent=0 // pred_check_branch
    %25 = sbr.rel (0) target = $region21
  $region20: #{tpu_custom_call.1} parent=0 // pred_region
    _
  $region21: #{tpu_custom_call.1} parent=0 // pred_fallthru
    _
  // Predicated region
  $region22: #{tpu_custom_call.1} parent=0 // pred_check
    _
  $region23: #{tpu_custom_call.1} parent=0 // pred_check_branch
    %27 = sbr.rel (0) target = $region25
  $region24: #{tpu_custom_call.1} parent=0 // pred_region
    _
  $region25: #{tpu_custom_call.1} parent=0 // pred_fallthru
    _
  // Predicated region
  $region26: #{tpu_custom_call.1} parent=0 // pred_check
    _
  $region27: #{tpu_custom_call.1} parent=0 // pred_check_branch
    %29 = sbr.rel (0) target = $region29
  $region28: #{tpu_custom_call.1} parent=0 // pred_region
    _
  $region29: #{tpu_custom_call.1} parent=0 // pred_fallthru
    _
  // Predicated region
  $region30: #{tpu_custom_call.1} parent=0 // pred_check
    _
  $region31: #{tpu_custom_call.1} parent=0 // pred_check_branch
    %31 = sbr.rel (0) target = $region33
  $region32: #{tpu_custom_call.1} parent=0 // pred_region
    _
  $region33: #{tpu_custom_call.1} parent=0 // pred_fallthru
    _
  // Predicated region
  $region34: #{tpu_custom_call.1} parent=0 // pred_check
    _
  $region35: #{tpu_custom_call.1} parent=0 // pred_check_branch
    %33 = sbr.rel (0) target = $region37
  $region36: #{tpu_custom_call.1} parent=0 // pred_region
    _
  $region37: #{tpu_custom_call.1} parent=0 // pred_fallthru
    _
  // Predicated region
  $region38: #{tpu_custom_call.1} parent=0 // pred_check
    _
  $region39: #{tpu_custom_call.1} parent=0 // pred_check_branch
    %35 = sbr.rel (0) target = $region41
  $region40: #{tpu_custom_call.1} parent=0 // pred_region
    _
  $region41: #{tpu_custom_call.1} parent=0 // pred_fallthru
    _
  %v36 = vld [vmem:[%s0] sm:$0xff]
  %v37 = vld [vmem:[%s4] sm:$0xff]
  %v38 = vld [vmem:[%s4 + $0x8] sm:$0xff]
  %v39 = vld [vmem:[%s4 + $0x10] sm:$0xff]
  %v40 = vld [vmem:[%s4 + $0x18] sm:$0xff]
  %v41 = vld [vmem:[%s5] sm:$0x1]
  %v43 = vlaneseq
  %v44 = vshrl.u32 %v43, 7
  %v45 = vsub.s32 0, %v44
  %v46 = vrot.slane %v41, %v45
  %vm48 = vcmask 261120
  %v50 = vsel %vm48, %v36, 0
  %52 = vmatprep.subr.mxu0 0.0
  %53 = vmatpush1.msra.mxu0 %v37
  %54 = vmatprep.subr.mxu0 0.0
  %55 = vmatpush1.msra.mxu0 %v38
  %56 = vmatprep.subr.mxu0 0.0
  %57 = vmatpush1.msra.mxu0 %v39
  %58 = vmatprep.subr.mxu0 0.0
  %59 = vmatpush1.msra.mxu0 %v40
  %60 = vmatprep.subr.mxu0 0.0
  %61 = vmatpush1.msra.mxu0 0.0
  %62 = vmatprep.subr.mxu0 0.0
  %63 = vmatpush1.msra.mxu0 0.0
  %64 = vmatprep.subr.mxu0 0.0
  %65 = vmatpush1.msra.mxu0 0.0
  %66 = vmatprep.subr.mxu0 0.0
  %67 = vmatpush1.msra.mxu0 0.0
  %68 = vmatprep.subr.mxu0 0.0
  %69 = vmatpush1.msra.mxu0 0.0
  %70 = vmatprep.subr.mxu0 0.0
  %71 = vmatpush1.msra.mxu0 0.0
  %72 = vmatprep.subr.mxu0 0.0
  %73 = vmatpush1.msra.mxu0 0.0
  %74 = vmatprep.subr.mxu0 0.0
  %75 = vmatpush1.msra.mxu0 0.0
  %76 = vmatprep.subr.mxu0 0.0
  %77 = vmatpush1.msra.mxu0 0.0
  %78 = vmatprep.subr.mxu0 0.0
  %79 = vmatpush1.msra.mxu0 0.0
  %80 = vmatprep.subr.mxu0 0.0
  %81 = vmatpush1.msra.mxu0 0.0
  %82 = vmatprep.subr.mxu0 0.0
  %83 = vmatpush1.msra.mxu0 0.0
  %84 = vmatprep.subr.mxu0 0.0
  %85 = vmatpush1.msra.mxu0 0.0
  %86 = vmatprep.subr.mxu0 0.0
  %87 = vmatpush1.msra.mxu0 0.0
  %88 = vmatprep.subr.mxu0 0.0
  %89 = vmatpush1.msra.mxu0 0.0
  %90 = vmatprep.subr.mxu0 0.0
  %91 = vmatpush1.msra.mxu0 0.0
  %92 = vmatprep.subr.mxu0 0.0
  %93 = vmatpush1.msra.mxu0 0.0
  %94 = vmatprep.subr.mxu0 0.0
  %95 = vmatpush1.msra.mxu0 0.0
  %96 = vmatprep.subr.mxu0 0.0
  %97 = vmatpush1.msra.mxu0 0.0
  %98 = vmatprep.subr.mxu0 0.0
  %99 = vmatpush1.msra.mxu0 0.0
  %100 = vmatprep.subr.mxu0 0.0
  %101 = vmatpush1.msra.mxu0 0.0
  %102 = vmatprep.subr.mxu0 0.0
  %103 = vmatpush1.msra.mxu0 0.0
  %104 = vmatprep.subr.mxu0 0.0
  %105 = vmatpush1.msra.mxu0 0.0
  %106 = vmatprep.subr.mxu0 0.0
  %107 = vmatpush1.msra.mxu0 0.0
  %108 = vmatprep.subr.mxu0 0.0
  %109 = vmatpush1.msra.mxu0 0.0
  %110 = vmatprep.subr.mxu0 0.0
  %111 = vmatpush1.msra.mxu0 0.0
  %112 = vmatprep.subr.mxu0 0.0
  %113 = vmatpush1.msra.mxu0 0.0
  %114 = vmatprep.subr.mxu0 0.0
  %115 = vmatpush1.msra.mxu0 0.0
  %116 = vmatprep.mubr.f32.mxu0 0.0
  %117 = vmatmul.mubr.f32.gmra.mrb[0].mxu0 %v50
  %v118 = vpop.f32.mrb[0].mxu0
  %v119 = vadd.f32 %v46, %v118
  %v120 = vpop.f32.mrb[0].mxu0
  %121 = vdwg.mxu0
  %v122 = vtanh.pop %v119
  %v123 = vld [vmem:[%s6] sm:$0xff]
  %v124 = vld [vmem:[%s6 + $0x8] sm:$0xff]
  %v125 = vld [vmem:[%s6 + $0x10] sm:$0xff]
  %v126 = vld [vmem:[%s6 + $0x18] sm:$0xff]
  %v127 = vld [vmem:[%s6 + $0x20] sm:$0xff]
  %v128 = vld [vmem:[%s6 + $0x28] sm:$0xff]
  %v129 = vld [vmem:[%s6 + $0x30] sm:$0xff]
  %v130 = vld [vmem:[%s6 + $0x38] sm:$0xff]
  %v131 = vld [vmem:[%s6 + $0x40] sm:$0xff]
  %v132 = vld [vmem:[%s6 + $0x48] sm:$0xff]
  %v133 = vld [vmem:[%s6 + $0x50] sm:$0xff]
  %v134 = vld [vmem:[%s6 + $0x58] sm:$0xff]
  %v135 = vld [vmem:[%s6 + $0x60] sm:$0xff]
  %v136 = vld [vmem:[%s6 + $0x68] sm:$0xff]
  %v137 = vld [vmem:[%s6 + $0x70] sm:$0xff]
  %v138 = vld [vmem:[%s6 + $0x78] sm:$0xff]
  %v139 = vld [vmem:[%s7] sm:$0x1]
  %v141 = vlaneseq
  %v142 = vshrl.u32 %v141, 7
  %v143 = vsub.s32 0, %v142
  %v144 = vrot.slane %v139, %v143
  %146 = vmatprep.subr.mxu0 0.0
  %147 = vmatpush1.msra.mxu0 %v123
  %148 = vmatprep.subr.mxu0 0.0
  %149 = vmatpush1.msra.mxu0 %v124
  %150 = vmatprep.subr.mxu0 0.0
  %151 = vmatpush1.msra.mxu0 %v125
  %152 = vmatprep.subr.mxu0 0.0
  %153 = vmatpush1.msra.mxu0 %v126
  %154 = vmatprep.subr.mxu0 0.0
  %155 = vmatpush1.msra.mxu0 %v127
  %156 = vmatprep.subr.mxu0 0.0
  %157 = vmatpush1.msra.mxu0 %v128
  %158 = vmatprep.subr.mxu0 0.0
  %159 = vmatpush1.msra.mxu0 %v129
  %160 = vmatprep.subr.mxu0 0.0
  %161 = vmatpush1.msra.mxu0 %v130
  %162 = vmatprep.subr.mxu0 0.0
  %163 = vmatpush1.msra.mxu0 %v131
  %164 = vmatprep.subr.mxu0 0.0
  %165 = vmatpush1.msra.mxu0 %v132
  %166 = vmatprep.subr.mxu0 0.0
  %167 = vmatpush1.msra.mxu0 %v133
  %168 = vmatprep.subr.mxu0 0.0
  %169 = vmatpush1.msra.mxu0 %v134
  %170 = vmatprep.subr.mxu0 0.0
  %171 = vmatpush1.msra.mxu0 %v135
  %172 = vmatprep.subr.mxu0 0.0
  %173 = vmatpush1.msra.mxu0 %v136
  %174 = vmatprep.subr.mxu0 0.0
  %175 = vmatpush1.msra.mxu0 %v137
  %176 = vmatprep.subr.mxu0 0.0
  %177 = vmatpush1.msra.mxu0 %v138
  %178 = vmatprep.subr.mxu0 0.0
  %179 = vmatpush1.msra.mxu0 0.0
  %180 = vmatprep.subr.mxu0 0.0
  %181 = vmatpush1.msra.mxu0 0.0
  %182 = vmatprep.subr.mxu0 0.0
  %183 = vmatpush1.msra.mxu0 0.0
  %184 = vmatprep.subr.mxu0 0.0
  %185 = vmatpush1.msra.mxu0 0.0
  %186 = vmatprep.subr.mxu0 0.0
  %187 = vmatpush1.msra.mxu0 0.0
  %188 = vmatprep.subr.mxu0 0.0
  %189 = vmatpush1.msra.mxu0 0.0
  %190 = vmatprep.subr.mxu0 0.0
  %191 = vmatpush1.msra.mxu0 0.0
  %192 = vmatprep.subr.mxu0 0.0
  %193 = vmatpush1.msra.mxu0 0.0
  %194 = vmatprep.subr.mxu0 0.0
  %195 = vmatpush1.msra.mxu0 0.0
  %196 = vmatprep.subr.mxu0 0.0
  %197 = vmatpush1.msra.mxu0 0.0
  %198 = vmatprep.subr.mxu0 0.0
  %199 = vmatpush1.msra.mxu0 0.0
  %200 = vmatprep.subr.mxu0 0.0
  %201 = vmatpush1.msra.mxu0 0.0
  %202 = vmatprep.subr.mxu0 0.0
  %203 = vmatpush1.msra.mxu0 0.0
  %204 = vmatprep.subr.mxu0 0.0
  %205 = vmatpush1.msra.mxu0 0.0
  %206 = vmatprep.subr.mxu0 0.0
  %207 = vmatpush1.msra.mxu0 0.0
  %208 = vmatprep.subr.mxu0 0.0
  %209 = vmatpush1.msra.mxu0 0.0
  %210 = vmatprep.mubr.f32.mxu0 0.0
  %211 = vmatmul.mubr.f32.gmra.mrb[0].mxu0 %v122
  %v212 = vpop.f32.mrb[0].mxu0
  %v213 = vadd.f32 %v144, %v212
  %v214 = vpop.f32.mrb[0].mxu0
  %215 = vdwg.mxu0
  %v216 = vtanh.pop %v213
  %v217 = vld [vmem:[%s8] sm:$0xff]
  %v218 = vld [vmem:[%s8 + $0x8] sm:$0xff]
  %v219 = vld [vmem:[%s8 + $0x10] sm:$0xff]
  %v220 = vld [vmem:[%s8 + $0x18] sm:$0xff]
  %v221 = vld [vmem:[%s8 + $0x20] sm:$0xff]
  %v222 = vld [vmem:[%s8 + $0x28] sm:$0xff]
  %v223 = vld [vmem:[%s8 + $0x30] sm:$0xff]
  %v224 = vld [vmem:[%s8 + $0x38] sm:$0xff]
  %v225 = vld [vmem:[%s9] sm:$0x1]
  %v227 = vlaneseq
  %v228 = vshrl.u32 %v227, 7
  %v229 = vsub.s32 0, %v228
  %v230 = vrot.slane %v225, %v229
  %vm232 = vcmask 523264
  %v234 = vsel %vm232, %v216, 0
  %236 = vmatprep.subr.mxu0 0.0
  %237 = vmatpush1.msra.mxu0 %v217
  %238 = vmatprep.subr.mxu0 0.0
  %239 = vmatpush1.msra.mxu0 %v218
  %240 = vmatprep.subr.mxu0 0.0
  %241 = vmatpush1.msra.mxu0 %v219
  %242 = vmatprep.subr.mxu0 0.0
  %243 = vmatpush1.msra.mxu0 %v220
  %244 = vmatprep.subr.mxu0 0.0
  %245 = vmatpush1.msra.mxu0 %v221
  %246 = vmatprep.subr.mxu0 0.0
  %247 = vmatpush1.msra.mxu0 %v222
  %248 = vmatprep.subr.mxu0 0.0
  %249 = vmatpush1.msra.mxu0 %v223
  %250 = vmatprep.subr.mxu0 0.0
  %251 = vmatpush1.msra.mxu0 %v224
  %252 = vmatprep.subr.mxu0 0.0
  %253 = vmatpush1.msra.mxu0 0.0
  %254 = vmatprep.subr.mxu0 0.0
  %255 = vmatpush1.msra.mxu0 0.0
  %256 = vmatprep.subr.mxu0 0.0
  %257 = vmatpush1.msra.mxu0 0.0
  %258 = vmatprep.subr.mxu0 0.0
  %259 = vmatpush1.msra.mxu0 0.0
  %260 = vmatprep.subr.mxu0 0.0
  %261 = vmatpush1.msra.mxu0 0.0
  %262 = vmatprep.subr.mxu0 0.0
  %263 = vmatpush1.msra.mxu0 0.0
  %264 = vmatprep.subr.mxu0 0.0
  %265 = vmatpush1.msra.mxu0 0.0
  %266 = vmatprep.subr.mxu0 0.0
  %267 = vmatpush1.msra.mxu0 0.0
  %268 = vmatprep.subr.mxu0 0.0
  %269 = vmatpush1.msra.mxu0 0.0
  %270 = vmatprep.subr.mxu0 0.0
  %271 = vmatpush1.msra.mxu0 0.0
  %272 = vmatprep.subr.mxu0 0.0
  %273 = vmatpush1.msra.mxu0 0.0
  %274 = vmatprep.subr.mxu0 0.0
  %275 = vmatpush1.msra.mxu0 0.0
  %276 = vmatprep.subr.mxu0 0.0
  %277 = vmatpush1.msra.mxu0 0.0
  %278 = vmatprep.subr.mxu0 0.0
  %279 = vmatpush1.msra.mxu0 0.0
  %280 = vmatprep.subr.mxu0 0.0
  %281 = vmatpush1.msra.mxu0 0.0
  %282 = vmatprep.subr.mxu0 0.0
  %283 = vmatpush1.msra.mxu0 0.0
  %284 = vmatprep.subr.mxu0 0.0
  %285 = vmatpush1.msra.mxu0 0.0
  %286 = vmatprep.subr.mxu0 0.0
  %287 = vmatpush1.msra.mxu0 0.0
  %288 = vmatprep.subr.mxu0 0.0
  %289 = vmatpush1.msra.mxu0 0.0
  %290 = vmatprep.subr.mxu0 0.0
  %291 = vmatpush1.msra.mxu0 0.0
  %292 = vmatprep.subr.mxu0 0.0
  %293 = vmatpush1.msra.mxu0 0.0
  %294 = vmatprep.subr.mxu0 0.0
  %295 = vmatpush1.msra.mxu0 0.0
  %296 = vmatprep.subr.mxu0 0.0
  %297 = vmatpush1.msra.mxu0 0.0
  %298 = vmatprep.subr.mxu0 0.0
  %299 = vmatpush1.msra.mxu0 0.0
  %300 = vmatprep.mubr.f32.mxu0 0.0
  %301 = vmatmul.mubr.f32.gmra.mrb[0].mxu0 %v234
  %v302 = vpop.f32.mrb[0].mxu0
  %v303 = vadd.f32 %v230, %v302
  %v304 = vpop.f32.mrb[0].mxu0
  %305 = vdwg.mxu0
  %v306 = vtanh.pop %v303
  %v307 = vld [vmem:[%s1] sm:$0xff]
  %v308 = vsub.f32 %v307, %v306
  %v309 = vmul.f32 %v308, %v308
  %v310 = vld [vmem:[%s2] sm:$0x1]
  %v312 = vlaneseq
  %v313 = vshrl.u32 %v312, 7
  %v314 = vsub.s32 0, %v313
  %v315 = vrot.slane %v310, %v314
  %v317 = vmul.f32 %v309, %v315
  %vm318 = vcmask 31744
  %v319 = vsel %vm318, %v317, 0.0
  %320 = vadd.xlane.f32.xlu0 %v319
  %v321 = vpop.xlane.xlu0 %320
  %s322 = sld [smem:[#allocation2]]
  %v323 = vmul.f32 %v321, 0.5
  %v324 = vstv %s322
  %v325 = vsub.f32 %v324, %v323
  %327 = vrot.lane.b32.xlu0 %v303, 125
  %v328 = vpop.permute.xlu0 %327
  %vm330 = vcmask 7168
  %v331 = vsel %vm330, %v325, %v328
  %vm332 = vcmask 15360
  %333 = vst.msk [vmem:[%s10] sm:$0xff] %vm332, %v331
  // Predicated region
  $region42: #{tpu_custom_call.1} parent=0 // pred_check
    _
  $region43: #{tpu_custom_call.1} parent=0 // pred_check_branch
    %335 = sbr.rel (0) target = $region45
  $region44: #{tpu_custom_call.1} parent=0 // pred_region
    _
  $region45: #{tpu_custom_call.1} parent=0 // pred_fallthru
    _
  // Predicated region
  $region46: #{tpu_custom_call.1} parent=0 // pred_check
    _
  $region47: #{tpu_custom_call.1} parent=0 // pred_check_branch
    %337 = sbr.rel (0) target = $region49
  $region48: #{tpu_custom_call.1} parent=0 // pred_region
    _
  $region49: #{tpu_custom_call.1} parent=0 // pred_fallthru
    _

</llo_original>
